<compile_context>
chip_gen: v5e
topology: v5e:2x2
jax: 0.10.0
libtpu: 0.0.40
codegen_flags: <defaults>
</compile_context>

<pallas_src>
import jax
import jax.numpy as jnp
from jax import lax
from jax.experimental import pallas as pl
from jax.experimental.pallas import tpu as pltpu


# --------------------------------------------------------------------------------------
# Kernel: one fused MXU matmul  [tb, D+V] @ [D+V, O_pad]  ->  [tb, O_pad]  (f32 accumulate)
# --------------------------------------------------------------------------------------
def _cross_embed_kernel(x_ref, idx_ref, w_ref, o_ref):
    x = x_ref[...]                                   # [tb, D]   compute dtype
    tb, d = x.shape
    v = w_ref.shape[0] - d
    # One-hot row selector for the embedding half of the merged weight (gather == one-hot matmul).
    onehot = (idx_ref[...] == lax.broadcasted_iota(jnp.int32, (tb, v), 1)).astype(x.dtype)
    lhs = jnp.concatenate([x, onehot], axis=-1)      # [tb, D+V]
    o_ref[...] = jnp.dot(
        lhs, w_ref[...], preferred_element_type=jnp.float32
    ).astype(o_ref.dtype)


# --------------------------------------------------------------------------------------
# One-time parameter preparation (cache the result across calls in a real model).
# --------------------------------------------------------------------------------------
def prepare_cross_embedding_params(dense_proj, onehot_embed, bias=None,
                                   compute_dtype=jnp.float32):
    assert dense_proj.ndim == 3 and dense_proj.shape[0] == 1
    _, out_features, dense_features = dense_proj.shape
    vocab, out_features_e = onehot_embed.shape
    assert out_features_e == out_features

    o_pad = ((out_features + 127) // 128) * 128

    proj_t = jnp.transpose(dense_proj[0].astype(jnp.float32), (1, 0))   # [D, O]  (one-time)
    embed = onehot_embed.astype(jnp.float32)
    if bias is not None:
        # Fold bias into the gather rows: (embed + bias)[idx] == embed[idx] + bias exactly.
        embed = embed + bias.astype(jnp.float32)[None, :]
    w = jnp.concatenate([proj_t, embed], axis=0)                         # [D+V, O]
    if o_pad != out_features:
        w = jnp.pad(w, ((0, 0), (0, o_pad - out_features)))              # lane-pad once
    w = w.astype(compute_dtype)

    return {
        "w": w,
        "dense_features": dense_features,
        "onehot_features": vocab,
        "output_features": out_features,
        "output_features_padded": o_pad,
        "compute_dtype": compute_dtype,
    }


def _pick_batch_tiling(batch):
    """Pick (tile_rows, padded_batch): >=4 grid steps preferred, >=2 accepted, tiles <= 512 rows
    so double-buffered [tb, O_pad] outputs stay inside v7x's 64 MiB / v5e's 16 MiB-scoped VMEM."""
    for min_steps in (4, 2):
        for cand in (512, 256, 128):
            if batch >= min_steps * cand:
                b_pad = -(-batch // cand) * cand
                return cand, b_pad
    # Small batch: single block, rows padded to a sublane multiple.
    b_pad = max(8, -(-batch // 8) * 8)
    return b_pad, b_pad


# --------------------------------------------------------------------------------------
# Apply with prepared (cached) parameters.
# --------------------------------------------------------------------------------------
def cross_embedding_apply(params, dense_x, onehot_idx):
    w = params["w"]
    d = params["dense_features"]
    v = params["onehot_features"]
    o = params["output_features"]
    o_pad = params["output_features_padded"]
    cdt = params["compute_dtype"]

    b = dense_x.shape[0]
    x = dense_x.reshape(b, -1)[:, :d].astype(cdt)
    # Clamp out-of-range indices (JAX fancy-indexing semantics; torch.Embedding would raise).
    idx = jnp.clip(onehot_idx.astype(jnp.int32), 0, v - 1).reshape(b, 1)

    tb, b_pad = _pick_batch_tiling(b)
    if b_pad != b:
        x = jnp.pad(x, ((0, b_pad - b), (0, 0)))
        idx = jnp.pad(idx, ((0, b_pad - b), (0, 0)))
    grid = (b_pad // tb,)

    # Grid-invariant merged weight: single-buffer it once it is large enough that the default
    # second pipeline copy actually matters for the VMEM budget.
    w_bytes = w.shape[0] * w.shape[1] * w.dtype.itemsize
    if w_bytes > (2 << 20):
        w_spec = pl.BlockSpec((d + v, o_pad), lambda i: (0, 0), pipeline_mode=pl.Buffered(1))
    else:
        w_spec = pl.BlockSpec((d + v, o_pad), lambda i: (0, 0))

    out_pad = pl.pallas_call(
        _cross_embed_kernel,
        out_shape=jax.ShapeDtypeStruct((b_pad, o_pad), jnp.float32),
        grid_spec=pltpu.PrefetchScalarGridSpec(
            num_scalar_prefetch=0,
            grid=grid,
            in_specs=[
                pl.BlockSpec((tb, d), lambda i: (i, 0)),      # x:   batch-tiled
                pl.BlockSpec((tb, 1), lambda i: (i, 0)),      # idx: batch-tiled
                w_spec,                                       # W:   resident across the grid
            ],
            out_specs=pl.BlockSpec((tb, o_pad), lambda i: (i, 0)),
        ),
        compiler_params=pltpu.CompilerParams(
            dimension_semantics=("parallel",),
            vmem_limit_bytes=32 * 1024 * 1024,   # explicit; re-derive for scaled O_pad / tb
        ),
    )(x, idx, w)

    out = out_pad
    if b_pad != b:
        out = out[:b]
    if o_pad != o:
        out = out[:, :o]
    return out


def cross_embedding(dense_x, onehot_idx, dense_proj, onehot_embed, bias=None,
                    compute_dtype=jnp.float32):
    """Convenience wrapper matching the module's forward; real models should cache params."""
    params = prepare_cross_embedding_params(dense_proj, onehot_embed, bias, compute_dtype)
    return cross_embedding_apply(params, dense_x, onehot_idx)


def reference(dense_x, onehot_idx, dense_proj, onehot_embed, bias):
    y1 = jnp.einsum("bd,od->bo", dense_x, dense_proj[0])
    y2 = onehot_embed[onehot_idx]
    out = y1 + y2
    if bias is not None:
        out = out + bias[None, :]
    return out


if __name__ == "__main__":
    # Small shapes consistent with the module's forward.
    B = 8          # batch
    D = 16         # dense_features
    V = 8          # onehot_features (embedding vocab)
    O = 32         # output_features

    key = jax.random.PRNGKey(0)
    k1, k2, k3, k4, k5 = jax.random.split(key, 5)

    dense_proj = jax.random.normal(k1, (1, O, D), jnp.float32)
    onehot_embed = jax.random.normal(k2, (V, O), jnp.float32)
    bias = 0.1 * jax.random.normal(k5, (O,), jnp.float32)

    dense_x = jax.random.normal(k3, (B, D), jnp.float32)
    onehot_idx = jax.random.randint(k4, (B,), 0, V, jnp.int32)

    # f32 path with prepared/cached params (bias folded into the embedding rows).
    params = prepare_cross_embedding_params(dense_proj, onehot_embed, bias)
    out = jax.block_until_ready(cross_embedding_apply(params, dense_x, onehot_idx))
    ref = reference(dense_x, onehot_idx, dense_proj, onehot_embed, bias)
    assert out.shape == (B, O)
    assert jnp.allclose(out, ref, atol=1e-5, rtol=1e-5), "mismatch vs reference (bias)"

    # No-bias path.
    out_nb = jax.block_until_ready(
        cross_embedding(dense_x, onehot_idx, dense_proj, onehot_embed, None))
    ref_nb = reference(dense_x, onehot_idx, dense_proj, onehot_embed, None)
    assert jnp.allclose(out_nb, ref_nb, atol=1e-5, rtol=1e-5), "mismatch vs reference (no bias)"

    # Larger, irregular batch -> multi-step grid with batch padding + slice-back.
    B2 = 260
    kx, ki = jax.random.split(jax.random.PRNGKey(2))
    dense_x2 = jax.random.normal(kx, (B2, D), jnp.float32)
    onehot_idx2 = jax.random.randint(ki, (B2,), 0, V, jnp.int32)
    out2 = jax.block_until_ready(cross_embedding_apply(params, dense_x2, onehot_idx2))
    ref2 = reference(dense_x2, onehot_idx2, dense_proj, onehot_embed, bias)
    assert out2.shape == (B2, O)
    assert jnp.allclose(out2, ref2, atol=1e-5, rtol=1e-5), "mismatch vs reference (large batch)"

    # bf16-operand path (v6e/v7x HBM-bandwidth lever), f32 accumulation -> loose tolerance.
    params_bf16 = prepare_cross_embedding_params(
        dense_proj, onehot_embed, bias, compute_dtype=jnp.bfloat16)
    out_bf = jax.block_until_ready(cross_embedding_apply(params_bf16, dense_x, onehot_idx))
    assert out_bf.dtype == jnp.float32
    assert jnp.allclose(out_bf, ref, rtol=5e-2, atol=5e-1), "mismatch vs reference (bf16 operands)"

    print("KERNEL_OK")
</pallas_src>

<mosaic_0001>
module attributes {stable_mosaic.version = 11 : i64} {
  func.func @_cross_embed_kernel(%arg0: i32, %arg1: memref<8x16xf32, #tpu.memory_space<vmem>>, %arg2: memref<8x1xi32, #tpu.memory_space<vmem>>, %arg3: memref<24x128xf32, #tpu.memory_space<vmem>>, %arg4: memref<8x128xf32, #tpu.memory_space<vmem>>) attributes {dimension_semantics = [#tpu.dimension_semantics<parallel>], iteration_bounds = array<i64: 1>, scalar_prefetch = 0 : i64, scratch_operands = 0 : i64, tpu.core_type = #tpu.core_type<tc>, window_params = [{transform_indices = @transform_0, window_bounds = array<i64: 8, 16>}, {transform_indices = @transform_1, window_bounds = array<i64: 8, 1>}, {pipeline_mode = #tpu.pipeline_mode<synchronous>, transform_indices = @transform_2, window_bounds = array<i64: 24, 128>}, {transform_indices = @transform_3, window_bounds = array<i64: 8, 128>}]} {
    %c0 = arith.constant 0 : index
    %c0_0 = arith.constant 0 : index
    %0 = vector.load %arg1[%c0, %c0_0] : memref<8x16xf32, #tpu.memory_space<vmem>>, vector<8x16xf32>
    %c0_1 = arith.constant 0 : index
    %c0_2 = arith.constant 0 : index
    %1 = vector.load %arg2[%c0_1, %c0_2] : memref<8x1xi32, #tpu.memory_space<vmem>>, vector<8x1xi32>
    %2 = tpu.iota {dimensions = array<i32: 1>} : vector<8x8xi32>
    %3 = vector.broadcast %1 : vector<8x1xi32> to vector<8x8xi32>
    %4 = arith.cmpi eq, %3, %2 : vector<8x8xi32>
    %5 = arith.extui %4 : vector<8x8xi1> to vector<8x8xi32>
    %6 = arith.sitofp %5 : vector<8x8xi32> to vector<8x8xf32>
    %7 = tpu.concatenate %0, %6 in 1 : vector<8x16xf32>, vector<8x8xf32> -> vector<8x24xf32>
    %c0_3 = arith.constant 0 : index
    %c0_4 = arith.constant 0 : index
    %8 = vector.load %arg3[%c0_3, %c0_4] : memref<24x128xf32, #tpu.memory_space<vmem>>, vector<24x128xf32>
    %cst = arith.constant dense<0.000000e+00> : vector<8x128xf32>
    %9 = tpu.matmul %7, %8, %cst {dimension_numbers = #tpu.dot_dimension_numbers<[1], [0], [0], [1], [0, 0, 1, 1], [], []>} : vector<8x24xf32>, vector<24x128xf32>, vector<8x128xf32> -> vector<8x128xf32>
    %c0_5 = arith.constant 0 : index
    %c0_6 = arith.constant 0 : index
    %10 = vector.load %arg4[%c0_5, %c0_6] : memref<8x128xf32, #tpu.memory_space<vmem>>, vector<8x128xf32>
    tpu.vector_store %arg4[%c0_5, %c0_6], %9 {strides = array<i32>} : memref<8x128xf32, #tpu.memory_space<vmem>>, vector<8x128xf32>,
    return
  }
  func.func @transform_0(%arg0: i32) -> (i32, i32) {
    %c0_i32 = arith.constant 0 : i32
    %c0_i32_0 = arith.constant 0 : i32
    return %arg0, %c0_i32 : i32, i32
  }
  func.func @transform_1(%arg0: i32) -> (i32, i32) {
    %c0_i32 = arith.constant 0 : i32
    %c0_i32_0 = arith.constant 0 : i32
    return %arg0, %c0_i32 : i32, i32
  }
  func.func @transform_2(%arg0: i32) -> (i32, i32) {
    %c0_i32 = arith.constant 0 : i32
    %c0_i32_0 = arith.constant 0 : i32
    %c0_i32_1 = arith.constant 0 : i32
    return %c0_i32, %c0_i32_0 : i32, i32
  }
  func.func @transform_3(%arg0: i32) -> (i32, i32) {
    %c0_i32 = arith.constant 0 : i32
    %c0_i32_0 = arith.constant 0 : i32
    return %arg0, %c0_i32 : i32, i32
  }
}

</mosaic_0001>

<llo_original>
// kernel: tpu_custom_call.1
$region0: #{tpu_custom_call.1}
  #allocation0 [shape = 'u32[]', space=smem, size = 0x4, offset = 0x4, fixed_abs, tag = 'smem constant byte address 0x4 - core index']
  #allocation1 [shape = 'u32[72,128]{1,0:T(1,128)}', space=vmem, size = 0x9000, scoped, tag = 'internal scratch']
  %s0 = inlined_call_operand.vmem [shape: f32[8,16], index: 0, kind: input, shape index: {}]
  %s1 = inlined_call_operand.vmem [shape: s32[8,1], index: 1, kind: input, shape index: {}]
  %s2 = inlined_call_operand.hbm [shape: f32[24,128], index: 2, kind: input, shape index: {}]
  %s3 = inlined_call_operand.hbm [shape: f32[8,128], index: 3, kind: output, shape index: {}]
  %s4 = sld [smem:[#allocation0]]
  $region26: #{tpu_custom_call.1} parent=0
    _
  %s6 = ssub.s32 1, %s4
  %s7 = scalar_select 0, %s6, %s4
  $region1: #{tpu_custom_call.1} parent=0
    #allocation2 [shape = 'u8[12288]{0}', space=vmem, size = 0x3000, scoped, tag = 'input window, operand 2, single buffered']
    #allocation3 [shape = 's32[1]{0}', space=sflag, size = 0x4, scoped, tag = 'scoped memory for tpu_custom_call.1']
    #allocation4 [shape = 's32[1]{0}', space=sflag, size = 0x4, scoped, tag = 'scoped memory for tpu_custom_call.1']
    #allocation5 [shape = 'u8[4096]{0}', space=vmem, size = 0x1000, scoped, tag = 'output window, operand 0, single buffered']
    %8 = vsyncpa [#allocation3], 0
    %9 = vsyncpa [#allocation4], 0
    // Predicated region
    $region2: #{tpu_custom_call.1} parent=1 // pred_check
      _
    $region3: #{tpu_custom_call.1} parent=1 // pred_check_branch
      %11 = sbr.rel (0) target = $region5
    $region4: #{tpu_custom_call.1} parent=1 // pred_region
      _
    $region5: #{tpu_custom_call.1} parent=1 // pred_fallthru
      _
    // Predicated region
    $region6: #{tpu_custom_call.1} parent=1 // pred_check
      _
    $region7: #{tpu_custom_call.1} parent=1 // pred_check_branch
      %13 = sbr.rel (0) target = $region9
    $region8: #{tpu_custom_call.1} parent=1 // pred_region
      _
    $region9: #{tpu_custom_call.1} parent=1 // pred_fallthru
      _
    // Predicated region
    $region10: #{tpu_custom_call.1} parent=1 // pred_check
      _
    $region11: #{tpu_custom_call.1} parent=1 // pred_check_branch
      %15 = sbr.rel (0) target = $region13
    $region12: #{tpu_custom_call.1} parent=1 // pred_region
      %17 = vsyncadd [#allocation3], 0
      %s18 = sshll.u32 %s2, 4
      %s19 = int_to_ptr.hbm [resolvable:$true] %s18
      %s20 = sshll.u32 [#allocation2], 4
      %s21 = int_to_ptr.vmem [resolvable:$true] %s20
      %26 = dma.hbm_to_vmem [thread:$0]  %s19, 384, %s21, [#allocation3], 128, 128, 8
    $region13: #{tpu_custom_call.1} parent=1 // pred_fallthru
      _
    // Predicated region
    $region14: #{tpu_custom_call.1} parent=1 // pred_check
      _
    $region15: #{tpu_custom_call.1} parent=1 // pred_check_branch
      %28 = sbr.rel (0) target = $region17
    $region16: #{tpu_custom_call.1} parent=1 // pred_region
      %30 = dma.done [#allocation3], 384
    $region17: #{tpu_custom_call.1} parent=1 // pred_fallthru
      _
    %v31 = vld [vmem:[%s0] sm:$0xff]
    %v32 = vld [vmem:[%s1] sm:$0xff]
    %v33 = vlaneseq
    %v34 = vand.u32 %v33, 127
    %35 = vset.pattern.permute.xlu0 0
    %36 = vperm.xlu0 %35, %v32
    %v37 = vpop.permute.xlu0 %36
    %vm38 = vcmp.eq.s32.totalorder %v37, %v34
    %v39 = vsel %vm38, 1, 0
    %v40 = vcvt.s32.f32 %v39
    %42 = vrot.lane.b32.xlu0 %v40, 16
    %v43 = vpop.permute.xlu0 %42
    %vm45 = vcmask 130048
    %v46 = vsel %vm45, %v31, %v43
    %v47 = vld [vmem:[#allocation2] sm:$0xff]
    %v48 = vld [vmem:[#allocation2 + $0x8] sm:$0xff]
    %v49 = vld [vmem:[#allocation2 + $0x10] sm:$0xff]
    %vm50 = vcmask 195584
    %v52 = vsel %vm50, %v46, 0
    %54 = vmatpush.msra.mxu0 0.0
    %55 = vmatpush.msra.mxu0 0.0
    %56 = vmatpush.msra.mxu0 0.0
    %57 = vmatpush.msra.mxu0 0.0
    %58 = vmatpush.msra.mxu0 0.0
    %59 = vmatpush.msra.mxu0 0.0
    %60 = vmatpush.msra.mxu0 0.0
    %61 = vmatpush.msra.mxu0 0.0
    %62 = vmatpush.msra.mxu0 0.0
    %63 = vmatpush.msra.mxu0 0.0
    %64 = vmatpush.msra.mxu0 0.0
    %65 = vmatpush.msra.mxu0 0.0
    %66 = vmatpush.msra.mxu0 0.0
    %67 = vmatpush.msra.mxu0 %v49
    %68 = vmatpush.msra.mxu0 %v48
    %69 = vmatpush.msra.mxu0 %v47
    %70 = vmatmul.f32.gmra.mxu0 %v52
    %v71 = vpop.f32.mrf.mxu0
    %v72 = vadd.f32 0.0, %v71
    %73 = vdwg.mxu0
    %74 = vst [vmem:[#allocation5] sm:$0xff] %v72
    // Predicated region
    $region18: #{tpu_custom_call.1} parent=1 // pred_check
      _
    $region19: #{tpu_custom_call.1} parent=1 // pred_check_branch
      %76 = sbr.rel (0) target = $region21
    $region20: #{tpu_custom_call.1} parent=1 // pred_region
      %78 = vsyncadd [#allocation4], 0
      %s80 = sshll.u32 [#allocation5], 4
      %s81 = int_to_ptr.vmem [resolvable:$true] %s80
      %s82 = sshll.u32 %s3, 4
      %s83 = int_to_ptr.hbm [resolvable:$true] %s82
      %85 = dma.vmem_to_hbm [thread:$0]  %s81, 128, %s83, [#allocation4]
    $region21: #{tpu_custom_call.1} parent=1 // pred_fallthru
      _
    // Predicated region
    $region22: #{tpu_custom_call.1} parent=1 // pred_check
      _
    $region23: #{tpu_custom_call.1} parent=1 // pred_check_branch
      %87 = sbr.rel (0) target = $region25
    $region24: #{tpu_custom_call.1} parent=1 // pred_region
      %89 = dma.done [#allocation4], 128
    $region25: #{tpu_custom_call.1} parent=1 // pred_fallthru
      _
    %90 = vsyncpa [#allocation3], 1
    %91 = vsyncpa [#allocation4], 1

</llo_original>
